<compile_context>
chip_gen: v6e
topology: v6e:2x2x1
jax: 0.10.0
libtpu: 0.0.40
codegen_flags: <defaults>
</compile_context>

<pallas_src>
import jax
import jax.numpy as jnp
from jax import lax
from jax.experimental import pallas as pl
from jax.experimental.pallas import tpu as pltpu


# --------------------------------------------------------------------------
# Kernels
# --------------------------------------------------------------------------
def _actor_mlp_kernel(x_ref, w1_ref, b1_ref, w2_ref, b2_ref,
                      wmu_ref, bmu_ref, mu_ref):
    """S == 1 fast path: attention is the identity, so plain MLP."""
    x = x_ref[...].astype(jnp.bfloat16)                         # (Bb, Din)
    h = jnp.tanh(jnp.dot(x, w1_ref[...],
                         preferred_element_type=jnp.float32) + b1_ref[...])
    h = jnp.tanh(jnp.dot(h.astype(jnp.bfloat16), w2_ref[...],
                         preferred_element_type=jnp.float32) + b2_ref[...])
    mu = jnp.dot(h.astype(jnp.bfloat16), wmu_ref[...],
                 preferred_element_type=jnp.float32) + bmu_ref[...]
    mu_ref[...] = mu.astype(mu_ref.dtype)


def _actor_attn_kernel(x_ref, w1_ref, b1_ref, w2_ref, b2_ref,
                       wa_ref, ba_ref, wmu_ref, bmu_ref, mu_ref):
    """Full path (S > 1): fc1 -> tanh -> fc2 -> tanh -> attention -> fc_mu."""
    bb, s, d_in = x_ref.shape
    h_dim = w1_ref.shape[1]

    # Flatten batch*seq so the linear layers are single big MXU calls.
    x2d = x_ref[...].reshape(bb * s, d_in).astype(jnp.bfloat16)

    h = jnp.tanh(jnp.dot(x2d, w1_ref[...],
                         preferred_element_type=jnp.float32) + b1_ref[...])
    h = jnp.tanh(jnp.dot(h.astype(jnp.bfloat16), w2_ref[...],
                         preferred_element_type=jnp.float32) + b2_ref[...])
    h_bf = h.astype(jnp.bfloat16)                                # (Bb*S, H)

    # Attention: y = attn(h); scores = h @ y^T (per batch); softmax; p @ h
    y = jnp.dot(h_bf, wa_ref[...],
                preferred_element_type=jnp.float32) + ba_ref[...]

    hb = h_bf.reshape(bb, s, h_dim)                              # leading-dim split
    yb = y.astype(jnp.bfloat16).reshape(bb, s, h_dim)

    # einsum('bsh,bth->bst'): batch (0,0), contract (2,2)
    scores = lax.dot_general(hb, yb, (((2,), (2,)), ((0,), (0,))),
                             preferred_element_type=jnp.float32)  # (Bb, S, S)

    m = jnp.max(scores, axis=-1, keepdims=True)
    p = jnp.exp(scores - m)
    denom = jnp.sum(p, axis=-1, keepdims=True)
    p = p * pl.reciprocal(denom, approx=True)                     # EUP vrcp

    # einsum('bst,bth->bsh'): batch (0,0), contract lhs 2 with rhs 1
    attended = lax.dot_general(p.astype(jnp.bfloat16), hb,
                               (((2,), (1,)), ((0,), (0,))),
                               preferred_element_type=jnp.float32)  # (Bb, S, H)

    mu = jnp.dot(attended.reshape(bb * s, h_dim).astype(jnp.bfloat16),
                 wmu_ref[...],
                 preferred_element_type=jnp.float32) + bmu_ref[...]
    mu_ref[...] = mu.reshape(bb, s, -1).astype(mu_ref.dtype)


# --------------------------------------------------------------------------
# Block sizing
# --------------------------------------------------------------------------
def _pick_block_b(batch, seq, target_rows=1024):
    """Rows-per-step sizing.

    Single grid step when the whole batch fits a modest VMEM budget (no forced
    splitting on 1-TC v5e/v6e); otherwise a multiple-of-8 block targeting
    ~`target_rows` flattened (B*S) rows per step so MXU push/drain and the
    ~0.35us per-step overhead are amortized.  The grid uses pl.cdiv with a
    zero-padded tail block, so block_b need not divide B.
    """
    rows = batch * seq
    if rows <= 2 * target_rows:
        return batch
    bb = max(8, (target_rows // max(seq, 1)) // 8 * 8)
    return min(bb, batch)


# --------------------------------------------------------------------------
# Wrapper
# --------------------------------------------------------------------------
def actor_forward(x, w1, b1, w2, b2, wa, ba, wmu, bmu, log_sigma, *,
                  target_rows=1024):
    """Returns (mean, std_dev) matching ActorNN.forward's Normal(mean, std)."""
    H, Din = w1.shape
    Dout = wmu.shape[0]

    # One-time (XLA-side) weight prep: (out, in) -> (in, out), bf16 for MXU.
    w1t = w1.T.astype(jnp.bfloat16)
    w2t = w2.T.astype(jnp.bfloat16)
    wat = wa.T.astype(jnp.bfloat16)
    wmut = wmu.T.astype(jnp.bfloat16)
    b1r = b1.reshape(1, H).astype(jnp.float32)
    b2r = b2.reshape(1, H).astype(jnp.float32)
    bar = ba.reshape(1, H).astype(jnp.float32)
    bmur = bmu.reshape(1, Dout).astype(jnp.float32)

    std_dev = jnp.exp(log_sigma)

    # Mirror the PyTorch rank handling (unsqueeze / view(-1, S, H)).
    if x.ndim == 2:
        x3 = x[:, None, :]
    elif x.ndim > 3:
        x3 = x.reshape(-1, x.shape[-2], x.shape[-1])
    else:
        x3 = x
    B, S, _ = x3.shape
    squeeze_seq = (S == 1)
    common = dict(
        compiler_params=pltpu.CompilerParams(
            dimension_semantics=("parallel",)),
    )

    if squeeze_seq:
        # ---------- static S == 1 fast path (attention == identity) --------
        x2 = x3.reshape(B, Din)
        block_b = _pick_block_b(B, 1, target_rows)
        nblk = pl.cdiv(B, block_b)
        b_pad = nblk * block_b
        if b_pad != B:
            x2 = jnp.pad(x2, ((0, b_pad - B), (0, 0)))

        grid_spec = pltpu.PrefetchScalarGridSpec(
            num_scalar_prefetch=0,
            grid=(nblk,),
            in_specs=[
                pl.BlockSpec((block_b, Din), lambda i: (i, 0)),
                pl.BlockSpec((Din, H), lambda i: (0, 0)),    # fc1 W (resident)
                pl.BlockSpec((1, H), lambda i: (0, 0)),      # fc1 b
                pl.BlockSpec((H, H), lambda i: (0, 0)),      # fc2 W
                pl.BlockSpec((1, H), lambda i: (0, 0)),      # fc2 b
                pl.BlockSpec((H, Dout), lambda i: (0, 0)),   # fc_mu W
                pl.BlockSpec((1, Dout), lambda i: (0, 0)),   # fc_mu b
            ],
            out_specs=pl.BlockSpec((block_b, Dout), lambda i: (i, 0)),
        )
        mean = pl.pallas_call(
            _actor_mlp_kernel,
            out_shape=jax.ShapeDtypeStruct((b_pad, Dout), x.dtype),
            grid_spec=grid_spec,
            cost_estimate=pl.CostEstimate(
                flops=int(2 * b_pad * (Din * H + H * H + Dout * H)),
                transcendentals=int(2 * b_pad * H),
                bytes_accessed=int(4 * (x2.size + b_pad * Dout)
                                   + 2 * (w1t.size + w2t.size + wmut.size)
                                   + 4 * (2 * H + Dout))),
            **common,
        )(x2, w1t, b1r, w2t, b2r, wmut, bmur)
        mean = mean[:B]                                      # drop padded tail
    else:
        # -------------------------- attention path --------------------------
        block_b = _pick_block_b(B, S, target_rows)
        nblk = pl.cdiv(B, block_b)
        b_pad = nblk * block_b
        if b_pad != B:
            x3 = jnp.pad(x3, ((0, b_pad - B), (0, 0), (0, 0)))

        flops = (2 * b_pad * S * (Din * H + 2 * H * H + Dout * H)
                 + 4 * b_pad * S * S * H)
        grid_spec = pltpu.PrefetchScalarGridSpec(
            num_scalar_prefetch=0,
            grid=(nblk,),
            in_specs=[
                pl.BlockSpec((block_b, S, Din), lambda i: (i, 0, 0)),
                pl.BlockSpec((Din, H), lambda i: (0, 0)),    # fc1 W (resident)
                pl.BlockSpec((1, H), lambda i: (0, 0)),      # fc1 b
                pl.BlockSpec((H, H), lambda i: (0, 0)),      # fc2 W
                pl.BlockSpec((1, H), lambda i: (0, 0)),      # fc2 b
                pl.BlockSpec((H, H), lambda i: (0, 0)),      # attn W
                pl.BlockSpec((1, H), lambda i: (0, 0)),      # attn b
                pl.BlockSpec((H, Dout), lambda i: (0, 0)),   # fc_mu W
                pl.BlockSpec((1, Dout), lambda i: (0, 0)),   # fc_mu b
            ],
            out_specs=pl.BlockSpec((block_b, S, Dout), lambda i: (i, 0, 0)),
        )
        mean = pl.pallas_call(
            _actor_attn_kernel,
            out_shape=jax.ShapeDtypeStruct((b_pad, S, Dout), x.dtype),
            grid_spec=grid_spec,
            cost_estimate=pl.CostEstimate(
                flops=int(flops),
                transcendentals=int(b_pad * S * (2 * H + S + 1)),
                bytes_accessed=int(4 * (x3.size + b_pad * S * Dout)
                                   + 2 * (w1t.size + w2t.size + wat.size
                                          + wmut.size)
                                   + 4 * (3 * H + Dout))),
            **common,
        )(x3, w1t, b1r, w2t, b2r, wat, bar, wmut, bmur)
        mean = mean[:B]                                      # drop padded tail

    return mean, std_dev


# --------------------------------------------------------------------------
# Pure-JAX reference (mirror of PyTorch ActorNN.forward)
# --------------------------------------------------------------------------
def actor_reference(x, w1, b1, w2, b2, wa, ba, wmu, bmu, log_sigma):
    h = jnp.tanh(x @ w1.T + b1)
    h = jnp.tanh(h @ w2.T + b2)
    if h.ndim == 2:
        h = h[:, None, :]
    elif h.ndim > 3:
        h = h.reshape(-1, h.shape[-2], h.shape[-1])
    y = jnp.einsum("bsh,oh->bso", h, wa) + ba
    scores = jnp.einsum("bsh,bth->bst", h, y)
    p = jax.nn.softmax(scores, axis=-1)
    att = jnp.einsum("bst,bth->bsh", p, h)
    if att.shape[1] == 1:
        att = att[:, 0, :]
    mean = att @ wmu.T + bmu
    return mean, jnp.exp(log_sigma)


# --------------------------------------------------------------------------
# Self-test
# --------------------------------------------------------------------------
if __name__ == "__main__":
    key = jax.random.PRNGKey(0)
    keys = jax.random.split(key, 10)

    D_IN, HID, D_OUT = 24, 64, 4

    w1 = jax.random.normal(keys[0], (HID, D_IN), jnp.float32) * 0.15
    b1 = jnp.zeros((HID,), jnp.float32)                 # nn.init.constant_(bias, 0)
    w2 = jax.random.normal(keys[1], (HID, HID), jnp.float32) * 0.12
    b2 = jnp.zeros((HID,), jnp.float32)
    wa = jax.random.normal(keys[2], (HID, HID), jnp.float32) * 0.12
    ba = jax.random.normal(keys[3], (HID,), jnp.float32) * 0.05
    wmu = jax.random.normal(keys[4], (D_OUT, HID), jnp.float32) * 0.15
    bmu = jnp.zeros((D_OUT,), jnp.float32)
    log_sigma = jnp.zeros((D_OUT,), jnp.float32)
    context_vector = jax.random.normal(keys[5], (HID,), jnp.float32)  # unused in forward()

    params = (w1, b1, w2, b2, wa, ba, wmu, bmu, log_sigma)
    TOL = dict(atol=2e-2, rtol=2e-2)    # bf16 MXU operands, f32 accumulation

    # 1) 3-D input (batch, seq, 24): full attention path, single grid step.
    x3 = jax.random.normal(keys[6], (2, 8, D_IN), jnp.float32)
    mean3, std3 = actor_forward(x3, *params)
    mean3 = jax.block_until_ready(mean3)
    ref3, ref_std3 = actor_reference(x3, *params)
    assert mean3.shape == (2, 8, D_OUT)
    assert jnp.allclose(mean3, ref3, **TOL)
    assert jnp.allclose(std3, ref_std3)

    # 2) 2-D input (batch, 24): the typical PPO observation -> S==1 fast path.
    x2 = jax.random.normal(keys[7], (4, D_IN), jnp.float32)
    mean2, _ = actor_forward(x2, *params)
    mean2 = jax.block_until_ready(mean2)
    ref2, _ = actor_reference(x2, *params)
    assert mean2.shape == (4, D_OUT)
    assert jnp.allclose(mean2, ref2, **TOL)

    # 3) Non-divisible batch on the attention path: cdiv grid + padded tail.
    x3b = jax.random.normal(keys[8], (20, 8, D_IN), jnp.float32)
    mean3b, _ = actor_forward(x3b, *params, target_rows=48)
    mean3b = jax.block_until_ready(mean3b)
    ref3b, _ = actor_reference(x3b, *params)
    assert mean3b.shape == (20, 8, D_OUT)
    assert jnp.allclose(mean3b, ref3b, **TOL)

    # 4) Non-divisible batch on the fast path: multi-step grid + padded tail.
    x2b = jax.random.normal(keys[9], (50, D_IN), jnp.float32)
    mean2b, _ = actor_forward(x2b, *params, target_rows=16)
    mean2b = jax.block_until_ready(mean2b)
    ref2b, _ = actor_reference(x2b, *params)
    assert mean2b.shape == (50, D_OUT)
    assert jnp.allclose(mean2b, ref2b, **TOL)

    print("KERNEL_OK")
</pallas_src>

<mosaic_0001>
module attributes {stable_mosaic.version = 11 : i64} {
  func.func @_actor_attn_kernel(%arg0: i32, %arg1: memref<2x8x24xf32, #tpu.memory_space<vmem>>, %arg2: memref<24x64xbf16, #tpu.memory_space<vmem>>, %arg3: memref<1x64xf32, #tpu.memory_space<vmem>>, %arg4: memref<64x64xbf16, #tpu.memory_space<vmem>>, %arg5: memref<1x64xf32, #tpu.memory_space<vmem>>, %arg6: memref<64x64xbf16, #tpu.memory_space<vmem>>, %arg7: memref<1x64xf32, #tpu.memory_space<vmem>>, %arg8: memref<64x4xbf16, #tpu.memory_space<vmem>>, %arg9: memref<1x4xf32, #tpu.memory_space<vmem>>, %arg10: memref<2x8x4xf32, #tpu.memory_space<vmem>>) attributes {dimension_semantics = [#tpu.dimension_semantics<parallel>], iteration_bounds = array<i64: 1>, scalar_prefetch = 0 : i64, scratch_operands = 0 : i64, tpu.core_type = #tpu.core_type<tc>, window_params = [{transform_indices = @transform_0, window_bounds = array<i64: 2, 8, 24>}, {pipeline_mode = #tpu.pipeline_mode<synchronous>, transform_indices = @transform_1, window_bounds = array<i64: 24, 64>}, {pipeline_mode = #tpu.pipeline_mode<synchronous>, transform_indices = @transform_2, window_bounds = array<i64: 1, 64>}, {pipeline_mode = #tpu.pipeline_mode<synchronous>, transform_indices = @transform_3, window_bounds = array<i64: 64, 64>}, {pipeline_mode = #tpu.pipeline_mode<synchronous>, transform_indices = @transform_4, window_bounds = array<i64: 1, 64>}, {pipeline_mode = #tpu.pipeline_mode<synchronous>, transform_indices = @transform_5, window_bounds = array<i64: 64, 64>}, {pipeline_mode = #tpu.pipeline_mode<synchronous>, transform_indices = @transform_6, window_bounds = array<i64: 1, 64>}, {pipeline_mode = #tpu.pipeline_mode<synchronous>, transform_indices = @transform_7, window_bounds = array<i64: 64, 4>}, {pipeline_mode = #tpu.pipeline_mode<synchronous>, transform_indices = @transform_8, window_bounds = array<i64: 1, 4>}, {transform_indices = @transform_9, window_bounds = array<i64: 2, 8, 4>}]} {
    %c0 = arith.constant 0 : index
    %c0_0 = arith.constant 0 : index
    %c0_1 = arith.constant 0 : index
    %0 = vector.load %arg1[%c0, %c0_0, %c0_1] : memref<2x8x24xf32, #tpu.memory_space<vmem>>, vector<2x8x24xf32>
    %1 = vector.shape_cast %0 : vector<2x8x24xf32> to vector<16x24xf32>
    %2 = arith.truncf %1 : vector<16x24xf32> to vector<16x24xbf16>
    %c0_2 = arith.constant 0 : index
    %c0_3 = arith.constant 0 : index
    %3 = vector.load %arg2[%c0_2, %c0_3] : memref<24x64xbf16, #tpu.memory_space<vmem>>, vector<24x64xbf16>
    %cst = arith.constant dense<0.000000e+00> : vector<16x64xf32>
    %4 = tpu.matmul %2, %3, %cst {dimension_numbers = #tpu.dot_dimension_numbers<[1], [0], [0], [1], [0, 0, 1, 1], [], []>} : vector<16x24xbf16>, vector<24x64xbf16>, vector<16x64xf32> -> vector<16x64xf32>
    %c0_4 = arith.constant 0 : index
    %c0_5 = arith.constant 0 : index
    %5 = vector.load %arg3[%c0_4, %c0_5] : memref<1x64xf32, #tpu.memory_space<vmem>>, vector<1x64xf32>
    %6 = vector.broadcast %5 : vector<1x64xf32> to vector<16x64xf32>
    %7 = arith.addf %4, %6 : vector<16x64xf32>
    %8 = math.tanh %7 : vector<16x64xf32>
    %9 = arith.truncf %8 : vector<16x64xf32> to vector<16x64xbf16>
    %c0_6 = arith.constant 0 : index
    %c0_7 = arith.constant 0 : index
    %10 = vector.load %arg4[%c0_6, %c0_7] : memref<64x64xbf16, #tpu.memory_space<vmem>>, vector<64x64xbf16>
    %cst_8 = arith.constant dense<0.000000e+00> : vector<16x64xf32>
    %11 = tpu.matmul %9, %10, %cst_8 {dimension_numbers = #tpu.dot_dimension_numbers<[1], [0], [0], [1], [0, 0, 1, 1], [], []>} : vector<16x64xbf16>, vector<64x64xbf16>, vector<16x64xf32> -> vector<16x64xf32>
    %c0_9 = arith.constant 0 : index
    %c0_10 = arith.constant 0 : index
    %12 = vector.load %arg5[%c0_9, %c0_10] : memref<1x64xf32, #tpu.memory_space<vmem>>, vector<1x64xf32>
    %13 = vector.broadcast %12 : vector<1x64xf32> to vector<16x64xf32>
    %14 = arith.addf %11, %13 : vector<16x64xf32>
    %15 = math.tanh %14 : vector<16x64xf32>
    %16 = arith.truncf %15 : vector<16x64xf32> to vector<16x64xbf16>
    %c0_11 = arith.constant 0 : index
    %c0_12 = arith.constant 0 : index
    %17 = vector.load %arg6[%c0_11, %c0_12] : memref<64x64xbf16, #tpu.memory_space<vmem>>, vector<64x64xbf16>
    %cst_13 = arith.constant dense<0.000000e+00> : vector<16x64xf32>
    %18 = tpu.matmul %16, %17, %cst_13 {dimension_numbers = #tpu.dot_dimension_numbers<[1], [0], [0], [1], [0, 0, 1, 1], [], []>} : vector<16x64xbf16>, vector<64x64xbf16>, vector<16x64xf32> -> vector<16x64xf32>
    %c0_14 = arith.constant 0 : index
    %c0_15 = arith.constant 0 : index
    %19 = vector.load %arg7[%c0_14, %c0_15] : memref<1x64xf32, #tpu.memory_space<vmem>>, vector<1x64xf32>
    %20 = vector.broadcast %19 : vector<1x64xf32> to vector<16x64xf32>
    %21 = arith.addf %18, %20 : vector<16x64xf32>
    %22 = vector.shape_cast %16 : vector<16x64xbf16> to vector<2x8x64xbf16>
    %23 = arith.truncf %21 : vector<16x64xf32> to vector<16x64xbf16>
    %24 = vector.shape_cast %23 : vector<16x64xbf16> to vector<2x8x64xbf16>
    %cst_16 = arith.constant dense<0.000000e+00> : vector<2x8x8xf32>
    %25 = tpu.matmul %22, %24, %cst_16 {dimension_numbers = #tpu.dot_dimension_numbers<[2], [2], [1], [1], [0, 0, 0, 1, 1, 1], [0], [0]>} : vector<2x8x64xbf16>, vector<2x8x64xbf16>, vector<2x8x8xf32> -> vector<2x8x8xf32>
    %cst_17 = arith.constant dense<0xFF800000> : vector<2x8xf32>
    %26 = vector.multi_reduction <maximumf>, %25, %cst_17 [2] : vector<2x8x8xf32> to vector<2x8xf32>
    %27 = vector.shape_cast %26 : vector<2x8xf32> to vector<2x8x1xf32>
    %28 = vector.broadcast %27 : vector<2x8x1xf32> to vector<2x8x8xf32>
    %29 = arith.subf %25, %28 : vector<2x8x8xf32>
    %30 = math.exp %29 : vector<2x8x8xf32>
    %cst_18 = arith.constant dense<0.000000e+00> : vector<2x8xf32>
    %31 = vector.multi_reduction <add>, %30, %cst_18 [2] : vector<2x8x8xf32> to vector<2x8xf32>
    %32 = vector.shape_cast %31 : vector<2x8xf32> to vector<2x8x1xf32>
    %33 = tpu.reciprocal %32 {approx = true} : vector<2x8x1xf32> -> vector<2x8x1xf32>
    %34 = vector.broadcast %33 : vector<2x8x1xf32> to vector<2x8x8xf32>
    %35 = arith.mulf %30, %34 : vector<2x8x8xf32>
    %36 = arith.truncf %35 : vector<2x8x8xf32> to vector<2x8x8xbf16>
    %cst_19 = arith.constant dense<0.000000e+00> : vector<2x8x64xf32>
    %37 = tpu.matmul %36, %22, %cst_19 {dimension_numbers = #tpu.dot_dimension_numbers<[2], [1], [1], [2], [0, 0, 0, 1, 1, 2], [0], [0]>} : vector<2x8x8xbf16>, vector<2x8x64xbf16>, vector<2x8x64xf32> -> vector<2x8x64xf32>
    %38 = vector.shape_cast %37 : vector<2x8x64xf32> to vector<16x64xf32>
    %39 = arith.truncf %38 : vector<16x64xf32> to vector<16x64xbf16>
    %c0_20 = arith.constant 0 : index
    %c0_21 = arith.constant 0 : index
    %40 = vector.load %arg8[%c0_20, %c0_21] : memref<64x4xbf16, #tpu.memory_space<vmem>>, vector<64x4xbf16>
    %cst_22 = arith.constant dense<0.000000e+00> : vector<16x4xf32>
    %41 = tpu.matmul %39, %40, %cst_22 {dimension_numbers = #tpu.dot_dimension_numbers<[1], [0], [0], [1], [0, 0, 1, 1], [], []>} : vector<16x64xbf16>, vector<64x4xbf16>, vector<16x4xf32> -> vector<16x4xf32>
    %c0_23 = arith.constant 0 : index
    %c0_24 = arith.constant 0 : index
    %42 = vector.load %arg9[%c0_23, %c0_24] : memref<1x4xf32, #tpu.memory_space<vmem>>, vector<1x4xf32>
    %43 = vector.broadcast %42 : vector<1x4xf32> to vector<16x4xf32>
    %44 = arith.addf %41, %43 : vector<16x4xf32>
    %45 = vector.shape_cast %44 : vector<16x4xf32> to vector<2x8x4xf32>
    %c0_25 = arith.constant 0 : index
    %c0_26 = arith.constant 0 : index
    %c0_27 = arith.constant 0 : index
    %46 = vector.load %arg10[%c0_25, %c0_26, %c0_27] : memref<2x8x4xf32, #tpu.memory_space<vmem>>, vector<2x8x4xf32>
    tpu.vector_store %arg10[%c0_25, %c0_26, %c0_27], %45 {strides = array<i32>} : memref<2x8x4xf32, #tpu.memory_space<vmem>>, vector<2x8x4xf32>,
    return
  }
  func.func @transform_0(%arg0: i32) -> (i32, i32, i32) {
    %c0_i32 = arith.constant 0 : i32
    %c0_i32_0 = arith.constant 0 : i32
    %c0_i32_1 = arith.constant 0 : i32
    return %arg0, %c0_i32, %c0_i32_0 : i32, i32, i32
  }
  func.func @transform_1(%arg0: i32) -> (i32, i32) {
    %c0_i32 = arith.constant 0 : i32
    %c0_i32_0 = arith.constant 0 : i32
    %c0_i32_1 = arith.constant 0 : i32
    return %c0_i32, %c0_i32_0 : i32, i32
  }
  func.func @transform_2(%arg0: i32) -> (i32, i32) {
    %c0_i32 = arith.constant 0 : i32
    %c0_i32_0 = arith.constant 0 : i32
    %c0_i32_1 = arith.constant 0 : i32
    return %c0_i32, %c0_i32_0 : i32, i32
  }
  func.func @transform_3(%arg0: i32) -> (i32, i32) {
    %c0_i32 = arith.constant 0 : i32
    %c0_i32_0 = arith.constant 0 : i32
    %c0_i32_1 = arith.constant 0 : i32
    return %c0_i32, %c0_i32_0 : i32, i32
  }
  func.func @transform_4(%arg0: i32) -> (i32, i32) {
    %c0_i32 = arith.constant 0 : i32
    %c0_i32_0 = arith.constant 0 : i32
    %c0_i32_1 = arith.constant 0 : i32
    return %c0_i32, %c0_i32_0 : i32, i32
  }
  func.func @transform_5(%arg0: i32) -> (i32, i32) {
    %c0_i32 = arith.constant 0 : i32
    %c0_i32_0 = arith.constant 0 : i32
    %c0_i32_1 = arith.constant 0 : i32
    return %c0_i32, %c0_i32_0 : i32, i32
  }
  func.func @transform_6(%arg0: i32) -> (i32, i32) {
    %c0_i32 = arith.constant 0 : i32
    %c0_i32_0 = arith.constant 0 : i32
    %c0_i32_1 = arith.constant 0 : i32
    return %c0_i32, %c0_i32_0 : i32, i32
  }
  func.func @transform_7(%arg0: i32) -> (i32, i32) {
    %c0_i32 = arith.constant 0 : i32
    %c0_i32_0 = arith.constant 0 : i32
    %c0_i32_1 = arith.constant 0 : i32
    return %c0_i32, %c0_i32_0 : i32, i32
  }
  func.func @transform_8(%arg0: i32) -> (i32, i32) {
    %c0_i32 = arith.constant 0 : i32
    %c0_i32_0 = arith.constant 0 : i32
    %c0_i32_1 = arith.constant 0 : i32
    return %c0_i32, %c0_i32_0 : i32, i32
  }
  func.func @transform_9(%arg0: i32) -> (i32, i32, i32) {
    %c0_i32 = arith.constant 0 : i32
    %c0_i32_0 = arith.constant 0 : i32
    %c0_i32_1 = arith.constant 0 : i32
    return %arg0, %c0_i32, %c0_i32_0 : i32, i32, i32
  }
}

</mosaic_0001>

<llo_original>
// kernel: tpu_custom_call.1
$region0: #{tpu_custom_call.1}
  #allocation0 [shape = 'u32[]', space=smem, size = 0x4, offset = 0x4, fixed_abs, tag = 'smem constant byte address 0x4 - core index']
  #allocation1 [shape = 'u32[144,128]{1,0:T(1,128)}', space=vmem, size = 0x12000, scoped, tag = 'internal scratch']
  %s0 = inlined_call_operand.hbm [shape: f32[2,8,24], index: 0, kind: input, shape index: {}]
  %s1 = inlined_call_operand.hbm [shape: bf16[24,64], index: 1, kind: input, shape index: {}]
  %s2 = inlined_call_operand.vmem [shape: f32[1,64], index: 2, kind: input, shape index: {}]
  %s3 = inlined_call_operand.vmem [shape: bf16[64,64], index: 3, kind: input, shape index: {}]
  %s4 = inlined_call_operand.vmem [shape: f32[1,64], index: 4, kind: input, shape index: {}]
  %s5 = inlined_call_operand.hbm [shape: bf16[64,64], index: 5, kind: input, shape index: {}]
  %s6 = inlined_call_operand.vmem [shape: f32[1,64], index: 6, kind: input, shape index: {}]
  %s7 = inlined_call_operand.vmem [shape: bf16[64,4], index: 7, kind: input, shape index: {}]
  %s8 = inlined_call_operand.vmem [shape: f32[1,4], index: 8, kind: input, shape index: {}]
  %s9 = inlined_call_operand.vmem [shape: f32[2,8,4], index: 9, kind: output, shape index: {}]
  %s10 = sld [smem:[#allocation0]]
  $region58: #{tpu_custom_call.1} parent=0
    _
  %s12 = ssub.s32 1, %s10
  %s13 = scalar_select 0, %s12, %s10
  $region1: #{tpu_custom_call.1} parent=0
    #allocation2 [shape = 'u8[8192]{0}', space=vmem, size = 0x2000, scoped, tag = 'input window, operand 0, single buffered']
    #allocation3 [shape = 's32[1]{0}', space=sflag, size = 0x4, scoped, tag = 'scoped memory for tpu_custom_call.1']
    #allocation4 [shape = 'u8[6144]{0}', space=vmem, size = 0x1800, scoped, tag = 'input window, operand 1, single buffered']
    #allocation5 [shape = 's32[1]{0}', space=sflag, size = 0x4, scoped, tag = 'scoped memory for tpu_custom_call.1']
    #allocation6 [shape = 'u8[16384]{0}', space=vmem, size = 0x4000, scoped, tag = 'input window, operand 5, single buffered']
    %14 = vsyncpa [#allocation3], 0
    %15 = vsyncpa [#allocation5], 0
    // Predicated region
    $region2: #{tpu_custom_call.1} parent=1 // pred_check
      _
    $region3: #{tpu_custom_call.1} parent=1 // pred_check_branch
      %17 = sbr.rel (0) target = $region5
    $region4: #{tpu_custom_call.1} parent=1 // pred_region
      %s19 = ssub.s32 256, 256
      %20 = vsyncadd [#allocation3], %s19
      %s21 = sshll.u32 [#allocation2], 4
      %s22 = int_to_ptr.vmem [resolvable:$true] %s21
      %27 = dma.hbm_to_vmem [thread:$0]  %s0, 256, %s22, [#allocation3], 128, 128, 8
    $region5: #{tpu_custom_call.1} parent=1 // pred_fallthru
      _
    // Predicated region
    $region6: #{tpu_custom_call.1} parent=1 // pred_check
      _
    $region7: #{tpu_custom_call.1} parent=1 // pred_check_branch
      %29 = sbr.rel (0) target = $region9
    $region8: #{tpu_custom_call.1} parent=1 // pred_region
      %s31 = ssub.s32 192, 192
      %32 = vsyncadd [#allocation5], %s31
      %s33 = sshll.u32 [#allocation4], 4
      %s34 = int_to_ptr.vmem [resolvable:$true] %s33
      %39 = dma.hbm_to_vmem [thread:$0]  %s1, 192, %s34, [#allocation5], 64, 64, 4
    $region9: #{tpu_custom_call.1} parent=1 // pred_fallthru
      _
    // Predicated region
    $region10: #{tpu_custom_call.1} parent=1 // pred_check
      _
    $region11: #{tpu_custom_call.1} parent=1 // pred_check_branch
      %41 = sbr.rel (0) target = $region13
    $region12: #{tpu_custom_call.1} parent=1 // pred_region
      _
    $region13: #{tpu_custom_call.1} parent=1 // pred_fallthru
      _
    // Predicated region
    $region14: #{tpu_custom_call.1} parent=1 // pred_check
      _
    $region15: #{tpu_custom_call.1} parent=1 // pred_check_branch
      %43 = sbr.rel (0) target = $region17
    $region16: #{tpu_custom_call.1} parent=1 // pred_region
      _
    $region17: #{tpu_custom_call.1} parent=1 // pred_fallthru
      _
    // Predicated region
    $region18: #{tpu_custom_call.1} parent=1 // pred_check
      _
    $region19: #{tpu_custom_call.1} parent=1 // pred_check_branch
      %45 = sbr.rel (0) target = $region21
    $region20: #{tpu_custom_call.1} parent=1 // pred_region
      _
    $region21: #{tpu_custom_call.1} parent=1 // pred_fallthru
      _
    // Predicated region
    $region22: #{tpu_custom_call.1} parent=1 // pred_check
      _
    $region23: #{tpu_custom_call.1} parent=1 // pred_check_branch
      %47 = sbr.rel (0) target = $region25
    $region24: #{tpu_custom_call.1} parent=1 // pred_region
      %s49 = ssub.s32 512, 512
      %50 = vsyncadd [#allocation5], %s49
      %s51 = sshll.u32 [#allocation6], 4
      %s52 = int_to_ptr.vmem [resolvable:$true] %s51
      %57 = dma.hbm_to_vmem [thread:$0]  %s5, 512, %s52, [#allocation5], 64, 64, 4
    $region25: #{tpu_custom_call.1} parent=1 // pred_fallthru
      _
    // Predicated region
    $region26: #{tpu_custom_call.1} parent=1 // pred_check
      _
    $region27: #{tpu_custom_call.1} parent=1 // pred_check_branch
      %59 = sbr.rel (0) target = $region29
    $region28: #{tpu_custom_call.1} parent=1 // pred_region
      _
    $region29: #{tpu_custom_call.1} parent=1 // pred_fallthru
      _
    // Predicated region
    $region30: #{tpu_custom_call.1} parent=1 // pred_check
      _
    $region31: #{tpu_custom_call.1} parent=1 // pred_check_branch
      %61 = sbr.rel (0) target = $region33
    $region32: #{tpu_custom_call.1} parent=1 // pred_region
      _
    $region33: #{tpu_custom_call.1} parent=1 // pred_fallthru
      _
    // Predicated region
    $region34: #{tpu_custom_call.1} parent=1 // pred_check
      _
    $region35: #{tpu_custom_call.1} parent=1 // pred_check_branch
      %63 = sbr.rel (0) target = $region37
    $region36: #{tpu_custom_call.1} parent=1 // pred_region
      _
    $region37: #{tpu_custom_call.1} parent=1 // pred_fallthru
      _
    // Predicated region
    $region38: #{tpu_custom_call.1} parent=1 // pred_check
      _
    $region39: #{tpu_custom_call.1} parent=1 // pred_check_branch
      %65 = sbr.rel (0) target = $region41
    $region40: #{tpu_custom_call.1} parent=1 // pred_region
      %66 = dma.done [#allocation3], 256
    $region41: #{tpu_custom_call.1} parent=1 // pred_fallthru
      _
    // Predicated region
    $region42: #{tpu_custom_call.1} parent=1 // pred_check
      _
    $region43: #{tpu_custom_call.1} parent=1 // pred_check_branch
      %68 = sbr.rel (0) target = $region45
    $region44: #{tpu_custom_call.1} parent=1 // pred_region
      %69 = dma.done [#allocation5], 192
    $region45: #{tpu_custom_call.1} parent=1 // pred_fallthru
      _
    // Predicated region
    $region46: #{tpu_custom_call.1} parent=1 // pred_check
      _
    $region47: #{tpu_custom_call.1} parent=1 // pred_check_branch
      %71 = sbr.rel (0) target = $region49
    $region48: #{tpu_custom_call.1} parent=1 // pred_region
      %72 = dma.done [#allocation5], 512
    $region49: #{tpu_custom_call.1} parent=1 // pred_fallthru
      _
    %v74 = vld [vmem:[#allocation2] sm:$0xff]
    %v75 = vld [vmem:[#allocation2 + $0x8] sm:$0xff]
    %v76 = vpack.c.bf16 %v75, %v74
    %v77 = vld [vmem:[#allocation4] sm:$0xf]
    %v78 = vld [vmem:[#allocation4 + $0x4] sm:$0xf]
    %v79 = vld [vmem:[#allocation4 + $0x8] sm:$0xf]
    %v80 = vld [vmem:[%s2] sm:$0x1]
    %v82 = vlaneseq
    %v83 = vshrl.u32 %v82, 7
    %v84 = vsub.s32 0, %v83
    %v85 = vrot.slane %v80, %v84
    %v90 = vunpack.c.l.b16 %v77
    %v91 = vunpack.c.l.b16 %v78
    %v92 = vunpack.c.l.b16 %v79
    %v93 = vpack.c.b16 %v91, %v90
    %v94 = vpack.c.b16 %v92, %v92
    %vm96 = vcmask 195584
    %v98 = vsel %vm96, %v76, 0
    %vm100 = vcmask 1043456
    %v102 = vsel %vm100, %v94, 0
    %104 = vmatprep.subr.bf16.mxu0 0
    %105 = vmatpush1.bf16.msra.mxu0 0
    %106 = vmatprep.subr.bf16.mxu0 0
    %107 = vmatpush1.bf16.msra.mxu0 0
    %108 = vmatprep.subr.bf16.mxu0 0
    %109 = vmatpush1.bf16.msra.mxu0 0
    %110 = vmatprep.subr.bf16.mxu0 0
    %111 = vmatpush1.bf16.msra.mxu0 0
    %112 = vmatprep.subr.bf16.mxu0 0
    %113 = vmatpush1.bf16.msra.mxu0 0
    %114 = vmatprep.subr.bf16.mxu0 0
    %115 = vmatpush1.bf16.msra.mxu0 0
    %116 = vmatprep.subr.bf16.mxu0 0
    %117 = vmatpush1.bf16.msra.mxu0 %v102
    %118 = vmatprep.subr.bf16.mxu0 0
    %119 = vmatpush1.bf16.msra.mxu0 %v93
    %120 = vmatprep.subr.bf16.mxu0 0
    %121 = vmatpush2.bf16.msra.mxu0 0
    %122 = vmatprep.subr.bf16.mxu0 0
    %123 = vmatpush2.bf16.msra.mxu0 0
    %124 = vmatprep.subr.bf16.mxu0 0
    %125 = vmatpush2.bf16.msra.mxu0 0
    %126 = vmatprep.subr.bf16.mxu0 0
    %127 = vmatpush2.bf16.msra.mxu0 0
    %128 = vmatprep.subr.bf16.mxu0 0
    %129 = vmatpush2.bf16.msra.mxu0 0
    %130 = vmatprep.subr.bf16.mxu0 0
    %131 = vmatpush2.bf16.msra.mxu0 0
    %132 = vmatprep.subr.bf16.mxu0 0
    %133 = vmatpush2.bf16.msra.mxu0 0
    %134 = vmatprep.subr.bf16.mxu0 0
    %135 = vmatpush2.bf16.msra.mxu0 0
    %136 = vmatprep.mubr.bf16.mxu0 0
    %137 = vmatmul.mubr.bf16.gmra.mxu0 %v98
    %v138 = vpop.f32.mrf.mxu0
    %v139 = vadd.f32 %v85, %v138
    %v140 = vpop.f32.mrf.mxu0
    %v141 = vpop.f32.mrf.mxu0
    %v142 = vadd.f32 %v85, %v141
    %v143 = vpop.f32.mrf.mxu0
    %144 = vdwg.mxu0
    %v145 = vtanh.pop %v139
    %v146 = vtanh.pop %v142
    %v147 = vpack.c.bf16 %v146, %v145
    %v148 = vld [vmem:[%s3] sm:$0xf]
    %v149 = vld [vmem:[%s3 + $0x4] sm:$0xf]
    %v150 = vld [vmem:[%s3 + $0x8] sm:$0xf]
    %v151 = vld [vmem:[%s3 + $0xc] sm:$0xf]
    %v152 = vld [vmem:[%s3 + $0x10] sm:$0xf]
    %v153 = vld [vmem:[%s3 + $0x14] sm:$0xf]
    %v154 = vld [vmem:[%s3 + $0x18] sm:$0xf]
    %v155 = vld [vmem:[%s3 + $0x1c] sm:$0xf]
    %v156 = vld [vmem:[%s4] sm:$0x1]
    %v158 = vlaneseq
    %v159 = vshrl.u32 %v158, 7
    %v160 = vsub.s32 0, %v159
    %v161 = vrot.slane %v156, %v160
    %v171 = vunpack.c.l.b16 %v148
    %v172 = vunpack.c.l.b16 %v149
    %v173 = vunpack.c.l.b16 %v150
    %v174 = vunpack.c.l.b16 %v151
    %v175 = vunpack.c.l.b16 %v152
    %v176 = vunpack.c.l.b16 %v153
    %v177 = vunpack.c.l.b16 %v154
    %v178 = vunpack.c.l.b16 %v155
    %v179 = vpack.c.b16 %v172, %v171
    %v180 = vpack.c.b16 %v174, %v173
    %v181 = vpack.c.b16 %v176, %v175
    %v182 = vpack.c.b16 %v178, %v177
    %vm187 = vcmask 523264
    %v189 = vsel %vm187, %v147, 0
    %191 = vmatprep.subr.bf16.mxu0 0
    %192 = vmatpush1.bf16.msra.mxu0 0
    %193 = vmatprep.subr.bf16.mxu0 0
    %194 = vmatpush1.bf16.msra.mxu0 0
    %195 = vmatprep.subr.bf16.mxu0 0
    %196 = vmatpush1.bf16.msra.mxu0 0
    %197 = vmatprep.subr.bf16.mxu0 0
    %198 = vmatpush1.bf16.msra.mxu0 0
    %199 = vmatprep.subr.bf16.mxu0 0
    %200 = vmatpush1.bf16.msra.mxu0 %v182
    %201 = vmatprep.subr.bf16.mxu0 0
    %202 = vmatpush1.bf16.msra.mxu0 %v181
    %203 = vmatprep.subr.bf16.mxu0 0
    %204 = vmatpush1.bf16.msra.mxu0 %v180
    %205 = vmatprep.subr.bf16.mxu0 0
    %206 = vmatpush1.bf16.msra.mxu0 %v179
    %207 = vmatprep.subr.bf16.mxu0 0
    %208 = vmatpush2.bf16.msra.mxu0 0
    %209 = vmatprep.subr.bf16.mxu0 0
    %210 = vmatpush2.bf16.msra.mxu0 0
    %211 = vmatprep.subr.bf16.mxu0 0
    %212 = vmatpush2.bf16.msra.mxu0 0
    %213 = vmatprep.subr.bf16.mxu0 0
    %214 = vmatpush2.bf16.msra.mxu0 0
    %215 = vmatprep.subr.bf16.mxu0 0
    %216 = vmatpush2.bf16.msra.mxu0 0
    %217 = vmatprep.subr.bf16.mxu0 0
    %218 = vmatpush2.bf16.msra.mxu0 0
    %219 = vmatprep.subr.bf16.mxu0 0
    %220 = vmatpush2.bf16.msra.mxu0 0
    %221 = vmatprep.subr.bf16.mxu0 0
    %222 = vmatpush2.bf16.msra.mxu0 0
    %223 = vmatprep.mubr.bf16.mxu0 0
    %224 = vmatmul.mubr.bf16.gmra.mxu0 %v189
    %v225 = vpop.f32.mrf.mxu0
    %v226 = vadd.f32 %v161, %v225
    %v227 = vpop.f32.mrf.mxu0
    %v228 = vpop.f32.mrf.mxu0
    %v229 = vadd.f32 %v161, %v228
    %v230 = vpop.f32.mrf.mxu0
    %231 = vdwg.mxu0
    %v232 = vtanh.pop %v226
    %v233 = vtanh.pop %v229
    %v234 = vpack.c.bf16 %v233, %v232
    %v235 = vld [vmem:[#allocation6] sm:$0xf]
    %v236 = vld [vmem:[#allocation6 + $0x4] sm:$0xf]
    %v237 = vld [vmem:[#allocation6 + $0x8] sm:$0xf]
    %v238 = vld [vmem:[#allocation6 + $0xc] sm:$0xf]
    %v239 = vld [vmem:[#allocation6 + $0x10] sm:$0xf]
    %v240 = vld [vmem:[#allocation6 + $0x14] sm:$0xf]
    %v241 = vld [vmem:[#allocation6 + $0x18] sm:$0xf]
    %v242 = vld [vmem:[#allocation6 + $0x1c] sm:$0xf]
    %v243 = vld [vmem:[%s6] sm:$0x1]
    %v245 = vlaneseq
    %v246 = vshrl.u32 %v245, 7
    %v247 = vsub.s32 0, %v246
    %v248 = vrot.slane %v243, %v247
    %v258 = vunpack.c.l.b16 %v235
    %v259 = vunpack.c.l.b16 %v236
    %v260 = vunpack.c.l.b16 %v237
    %v261 = vunpack.c.l.b16 %v238
    %v262 = vunpack.c.l.b16 %v239
    %v263 = vunpack.c.l.b16 %v240
    %v264 = vunpack.c.l.b16 %v241
    %v265 = vunpack.c.l.b16 %v242
    %v266 = vpack.c.b16 %v259, %v258
    %v267 = vpack.c.b16 %v261, %v260
    %v268 = vpack.c.b16 %v263, %v262
    %v269 = vpack.c.b16 %v265, %v264
    %v275 = vsel %vm187, %v234, 0
    %277 = vmatprep.subr.bf16.mxu0 0
    %278 = vmatpush1.bf16.msra.mxu0 0
    %279 = vmatprep.subr.bf16.mxu0 0
    %280 = vmatpush1.bf16.msra.mxu0 0
    %281 = vmatprep.subr.bf16.mxu0 0
    %282 = vmatpush1.bf16.msra.mxu0 0
    %283 = vmatprep.subr.bf16.mxu0 0
    %284 = vmatpush1.bf16.msra.mxu0 0
    %285 = vmatprep.subr.bf16.mxu0 0
    %286 = vmatpush1.bf16.msra.mxu0 %v269
    %287 = vmatprep.subr.bf16.mxu0 0
    %288 = vmatpush1.bf16.msra.mxu0 %v268
    %289 = vmatprep.subr.bf16.mxu0 0
    %290 = vmatpush1.bf16.msra.mxu0 %v267
    %291 = vmatprep.subr.bf16.mxu0 0
    %292 = vmatpush1.bf16.msra.mxu0 %v266
    %293 = vmatprep.subr.bf16.mxu0 0
    %294 = vmatpush2.bf16.msra.mxu0 0
    %295 = vmatprep.subr.bf16.mxu0 0
    %296 = vmatpush2.bf16.msra.mxu0 0
    %297 = vmatprep.subr.bf16.mxu0 0
    %298 = vmatpush2.bf16.msra.mxu0 0
    %299 = vmatprep.subr.bf16.mxu0 0
    %300 = vmatpush2.bf16.msra.mxu0 0
    %301 = vmatprep.subr.bf16.mxu0 0
    %302 = vmatpush2.bf16.msra.mxu0 0
    %303 = vmatprep.subr.bf16.mxu0 0
    %304 = vmatpush2.bf16.msra.mxu0 0
    %305 = vmatprep.subr.bf16.mxu0 0
    %306 = vmatpush2.bf16.msra.mxu0 0
    %307 = vmatprep.subr.bf16.mxu0 0
    %308 = vmatpush2.bf16.msra.mxu0 0
    %309 = vmatprep.mubr.bf16.mxu0 0
    %310 = vmatmul.mubr.bf16.gmra.mxu0 %v275
    %v311 = vpop.f32.mrf.mxu0
    %v312 = vadd.f32 %v248, %v311
    %v313 = vpop.f32.mrf.mxu0
    %v314 = vpop.f32.mrf.mxu0
    %v315 = vadd.f32 %v248, %v314
    %v316 = vpop.f32.mrf.mxu0
    %317 = vdwg.mxu0
    %v319 = vunpack.c.l.b16 %v234
    %v320 = vunpack.c.h.b16 %v234
    %v321 = vpack.c.b16 %v319, %v319
    %v322 = vpack.c.b16 %v320, %v320
    %v323 = vpack.c.bf16 %v315, %v312
    %v325 = vunpack.c.l.b16 %v323
    %v326 = vunpack.c.h.b16 %v323
    %v327 = vpack.c.b16 %v325, %v325
    %v328 = vpack.c.b16 %v326, %v326
    %v330 = vsel %vm187, %v321, 0
    %v333 = vsel %vm187, %v327, 0
    %335 = vmatprep.subr.bf16.mxu0 0
    %336 = vmatpush1.bf16.xpose.msra.mxu0 0
    %337 = vmatprep.subr.bf16.mxu0 0
    %338 = vmatpush1.bf16.xpose.msra.mxu0 0
    %339 = vmatprep.subr.bf16.mxu0 0
    %340 = vmatpush1.bf16.xpose.msra.mxu0 0
    %341 = vmatprep.subr.bf16.mxu0 0
    %342 = vmatpush1.bf16.xpose.msra.mxu0 0
    %343 = vmatprep.subr.bf16.mxu0 0
    %344 = vmatpush1.bf16.xpose.msra.mxu0 0
    %345 = vmatprep.subr.bf16.mxu0 0
    %346 = vmatpush1.bf16.xpose.msra.mxu0 0
    %347 = vmatprep.subr.bf16.mxu0 0
    %348 = vmatpush1.bf16.xpose.msra.mxu0 0
    %349 = vmatprep.subr.bf16.mxu0 0
    %350 = vmatpush1.bf16.xpose.msra.mxu0 %v333
    %351 = vmatprep.subr.bf16.mxu0 0
    %352 = vmatpush2.bf16.xpose.msra.mxu0 0
    %353 = vmatprep.subr.bf16.mxu0 0
    %354 = vmatpush2.bf16.xpose.msra.mxu0 0
    %355 = vmatprep.subr.bf16.mxu0 0
    %356 = vmatpush2.bf16.xpose.msra.mxu0 0
    %357 = vmatprep.subr.bf16.mxu0 0
    %358 = vmatpush2.bf16.xpose.msra.mxu0 0
    %359 = vmatprep.subr.bf16.mxu0 0
    %360 = vmatpush2.bf16.xpose.msra.mxu0 0
    %361 = vmatprep.subr.bf16.mxu0 0
    %362 = vmatpush2.bf16.xpose.msra.mxu0 0
    %363 = vmatprep.subr.bf16.mxu0 0
    %364 = vmatpush2.bf16.xpose.msra.mxu0 0
    %365 = vmatprep.subr.bf16.mxu0 0
    %366 = vmatpush2.bf16.xpose.msra.mxu0 0
    %367 = vmatprep.mubr.bf16.mxu0 0
    %368 = vmatmul.mubr.bf16.gmra.mxu0 %v330
    %v369 = vpop.f32.mrf.mxu0
    %v370 = vadd.f32 0.0, %v369
    %v371 = vpop.f32.mrf.mxu0
    %v372 = vpop.f32.mrf.mxu0
    %v373 = vpop.f32.mrf.mxu0
    %374 = vdwg.mxu0
    %v376 = vsel %vm187, %v322, 0
    %v379 = vsel %vm187, %v328, 0
    %381 = vmatprep.subr.bf16.mxu0 0
    %382 = vmatpush1.bf16.xpose.msra.mxu0 0
    %383 = vmatprep.subr.bf16.mxu0 0
    %384 = vmatpush1.bf16.xpose.msra.mxu0 0
    %385 = vmatprep.subr.bf16.mxu0 0
    %386 = vmatpush1.bf16.xpose.msra.mxu0 0
    %387 = vmatprep.subr.bf16.mxu0 0
    %388 = vmatpush1.bf16.xpose.msra.mxu0 0
    %389 = vmatprep.subr.bf16.mxu0 0
    %390 = vmatpush1.bf16.xpose.msra.mxu0 0
    %391 = vmatprep.subr.bf16.mxu0 0
    %392 = vmatpush1.bf16.xpose.msra.mxu0 0
    %393 = vmatprep.subr.bf16.mxu0 0
    %394 = vmatpush1.bf16.xpose.msra.mxu0 0
    %395 = vmatprep.subr.bf16.mxu0 0
    %396 = vmatpush1.bf16.xpose.msra.mxu0 %v379
    %397 = vmatprep.subr.bf16.mxu0 0
    %398 = vmatpush2.bf16.xpose.msra.mxu0 0
    %399 = vmatprep.subr.bf16.mxu0 0
    %400 = vmatpush2.bf16.xpose.msra.mxu0 0
    %401 = vmatprep.subr.bf16.mxu0 0
    %402 = vmatpush2.bf16.xpose.msra.mxu0 0
    %403 = vmatprep.subr.bf16.mxu0 0
    %404 = vmatpush2.bf16.xpose.msra.mxu0 0
    %405 = vmatprep.subr.bf16.mxu0 0
    %406 = vmatpush2.bf16.xpose.msra.mxu0 0
    %407 = vmatprep.subr.bf16.mxu0 0
    %408 = vmatpush2.bf16.xpose.msra.mxu0 0
    %409 = vmatprep.subr.bf16.mxu0 0
    %410 = vmatpush2.bf16.xpose.msra.mxu0 0
    %411 = vmatprep.subr.bf16.mxu0 0
    %412 = vmatpush2.bf16.xpose.msra.mxu0 0
    %413 = vmatprep.mubr.bf16.mxu0 0
    %414 = vmatmul.mubr.bf16.gmra.mxu0 %v376
    %v415 = vpop.f32.mrf.mxu0
    %v416 = vadd.f32 0.0, %v415
    %v417 = vpop.f32.mrf.mxu0
    %v418 = vpop.f32.mrf.mxu0
    %v419 = vpop.f32.mrf.mxu0
    %420 = vdwg.mxu0
    %vm421 = vcmask 64512
    %v422 = vsel %vm421, %v370, -inf
    %423 = vmax.xlane.f32.xlu0 %v422
    %v424 = vpop.xlane.xlu0 %423
    %v425 = vsel %vm421, %v416, -inf
    %426 = vmax.xlane.f32.xlu0 %v425
    %v427 = vpop.xlane.xlu0 %426
    %v428 = vsub.f32 %v370, %v424
    %v429 = vsub.f32 %v416, %v427
    %v430 = vmul.f32 %v428, 1.442695
    %v431 = vpow.pop %v430
    %v432 = vmul.f32 %v429, 1.442695
    %v433 = vpow.pop %v432
    %v434 = vsel %vm421, %v431, 0.0
    %435 = vadd.xlane.f32.xlu0 %v434
    %v436 = vpop.xlane.xlu0 %435
    %v437 = vsel %vm421, %v433, 0.0
    %438 = vadd.xlane.f32.xlu0 %v437
    %v439 = vpop.xlane.xlu0 %438
    %v440 = vrcp.pop %v436
    %v441 = vrcp.pop %v439
    %v442 = vmul.f32 %v431, %v440
    %v443 = vmul.f32 %v433, %v441
    %v444 = vpack.c.bf16 %v442, %v442
    %v445 = vpack.c.bf16 %v443, %v443
    %v447 = vsel %vm421, %v444, 0
    %v449 = vsel %vm100, %v321, 0
    %451 = vmatprep.subr.bf16.mxu0 0
    %452 = vmatpush1.bf16.msra.mxu0 0
    %453 = vmatprep.subr.bf16.mxu0 0
    %454 = vmatpush1.bf16.msra.mxu0 0
    %455 = vmatprep.subr.bf16.mxu0 0
    %456 = vmatpush1.bf16.msra.mxu0 0
    %457 = vmatprep.subr.bf16.mxu0 0
    %458 = vmatpush1.bf16.msra.mxu0 0
    %459 = vmatprep.subr.bf16.mxu0 0
    %460 = vmatpush1.bf16.msra.mxu0 0
    %461 = vmatprep.subr.bf16.mxu0 0
    %462 = vmatpush1.bf16.msra.mxu0 0
    %463 = vmatprep.subr.bf16.mxu0 0
    %464 = vmatpush1.bf16.msra.mxu0 0
    %465 = vmatprep.subr.bf16.mxu0 0
    %466 = vmatpush1.bf16.msra.mxu0 %v449
    %467 = vmatprep.subr.bf16.mxu0 0
    %468 = vmatpush2.bf16.msra.mxu0 0
    %469 = vmatprep.subr.bf16.mxu0 0
    %470 = vmatpush2.bf16.msra.mxu0 0
    %471 = vmatprep.subr.bf16.mxu0 0
    %472 = vmatpush2.bf16.msra.mxu0 0
    %473 = vmatprep.subr.bf16.mxu0 0
    %474 = vmatpush2.bf16.msra.mxu0 0
    %475 = vmatprep.subr.bf16.mxu0 0
    %476 = vmatpush2.bf16.msra.mxu0 0
    %477 = vmatprep.subr.bf16.mxu0 0
    %478 = vmatpush2.bf16.msra.mxu0 0
    %479 = vmatprep.subr.bf16.mxu0 0
    %480 = vmatpush2.bf16.msra.mxu0 0
    %481 = vmatprep.subr.bf16.mxu0 0
    %482 = vmatpush2.bf16.msra.mxu0 0
    %483 = vmatprep.mubr.bf16.mxu0 0
    %484 = vmatmul.mubr.bf16.gmra.mxu0 %v447
    %v485 = vpop.f32.mrf.mxu0
    %v486 = vadd.f32 0.0, %v485
    %v487 = vpop.f32.mrf.mxu0
    %v488 = vpop.f32.mrf.mxu0
    %v489 = vpop.f32.mrf.mxu0
    %490 = vdwg.mxu0
    %v492 = vsel %vm421, %v445, 0
    %v494 = vsel %vm100, %v322, 0
    %496 = vmatprep.subr.bf16.mxu0 0
    %497 = vmatpush1.bf16.msra.mxu0 0
    %498 = vmatprep.subr.bf16.mxu0 0
    %499 = vmatpush1.bf16.msra.mxu0 0
    %500 = vmatprep.subr.bf16.mxu0 0
    %501 = vmatpush1.bf16.msra.mxu0 0
    %502 = vmatprep.subr.bf16.mxu0 0
    %503 = vmatpush1.bf16.msra.mxu0 0
    %504 = vmatprep.subr.bf16.mxu0 0
    %505 = vmatpush1.bf16.msra.mxu0 0
    %506 = vmatprep.subr.bf16.mxu0 0
    %507 = vmatpush1.bf16.msra.mxu0 0
    %508 = vmatprep.subr.bf16.mxu0 0
    %509 = vmatpush1.bf16.msra.mxu0 0
    %510 = vmatprep.subr.bf16.mxu0 0
    %511 = vmatpush1.bf16.msra.mxu0 %v494
    %512 = vmatprep.subr.bf16.mxu0 0
    %513 = vmatpush2.bf16.msra.mxu0 0
    %514 = vmatprep.subr.bf16.mxu0 0
    %515 = vmatpush2.bf16.msra.mxu0 0
    %516 = vmatprep.subr.bf16.mxu0 0
    %517 = vmatpush2.bf16.msra.mxu0 0
    %518 = vmatprep.subr.bf16.mxu0 0
    %519 = vmatpush2.bf16.msra.mxu0 0
    %520 = vmatprep.subr.bf16.mxu0 0
    %521 = vmatpush2.bf16.msra.mxu0 0
    %522 = vmatprep.subr.bf16.mxu0 0
    %523 = vmatpush2.bf16.msra.mxu0 0
    %524 = vmatprep.subr.bf16.mxu0 0
    %525 = vmatpush2.bf16.msra.mxu0 0
    %526 = vmatprep.subr.bf16.mxu0 0
    %527 = vmatpush2.bf16.msra.mxu0 0
    %528 = vmatprep.mubr.bf16.mxu0 0
    %529 = vmatmul.mubr.bf16.gmra.mxu0 %v492
    %v530 = vpop.f32.mrf.mxu0
    %v531 = vadd.f32 0.0, %v530
    %v532 = vpop.f32.mrf.mxu0
    %v533 = vpop.f32.mrf.mxu0
    %v534 = vpop.f32.mrf.mxu0
    %535 = vdwg.mxu0
    %v536 = vpack.c.bf16 %v531, %v486
    %v537 = vld [vmem:[%s7] sm:$0xf]
    %v538 = vld [vmem:[%s7 + $0x4] sm:$0xf]
    %v539 = vld [vmem:[%s7 + $0x8] sm:$0xf]
    %v540 = vld [vmem:[%s7 + $0xc] sm:$0xf]
    %v541 = vld [vmem:[%s7 + $0x10] sm:$0xf]
    %v542 = vld [vmem:[%s7 + $0x14] sm:$0xf]
    %v543 = vld [vmem:[%s7 + $0x18] sm:$0xf]
    %v544 = vld [vmem:[%s7 + $0x1c] sm:$0xf]
    %v545 = vld [vmem:[%s8] sm:$0x1]
    %v547 = vlaneseq
    %v548 = vshrl.u32 %v547, 7
    %v549 = vsub.s32 0, %v548
    %v550 = vrot.slane %v545, %v549
    %v560 = vunpack.c.l.b16 %v537
    %v561 = vunpack.c.l.b16 %v538
    %v562 = vunpack.c.l.b16 %v539
    %v563 = vunpack.c.l.b16 %v540
    %v564 = vunpack.c.l.b16 %v541
    %v565 = vunpack.c.l.b16 %v542
    %v566 = vunpack.c.l.b16 %v543
    %v567 = vunpack.c.l.b16 %v544
    %v568 = vpack.c.b16 %v561, %v560
    %v569 = vpack.c.b16 %v563, %v562
    %v570 = vpack.c.b16 %v565, %v564
    %v571 = vpack.c.b16 %v567, %v566
    %v577 = vsel %vm187, %v536, 0
    %579 = vmatprep.subr.bf16.mxu0 0
    %580 = vmatpush1.bf16.msra.mxu0 0
    %581 = vmatprep.subr.bf16.mxu0 0
    %582 = vmatpush1.bf16.msra.mxu0 0
    %583 = vmatprep.subr.bf16.mxu0 0
    %584 = vmatpush1.bf16.msra.mxu0 0
    %585 = vmatprep.subr.bf16.mxu0 0
    %586 = vmatpush1.bf16.msra.mxu0 0
    %587 = vmatprep.subr.bf16.mxu0 0
    %588 = vmatpush1.bf16.msra.mxu0 %v571
    %589 = vmatprep.subr.bf16.mxu0 0
    %590 = vmatpush1.bf16.msra.mxu0 %v570
    %591 = vmatprep.subr.bf16.mxu0 0
    %592 = vmatpush1.bf16.msra.mxu0 %v569
    %593 = vmatprep.subr.bf16.mxu0 0
    %594 = vmatpush1.bf16.msra.mxu0 %v568
    %595 = vmatprep.subr.bf16.mxu0 0
    %596 = vmatpush2.bf16.msra.mxu0 0
    %597 = vmatprep.subr.bf16.mxu0 0
    %598 = vmatpush2.bf16.msra.mxu0 0
    %599 = vmatprep.subr.bf16.mxu0 0
    %600 = vmatpush2.bf16.msra.mxu0 0
    %601 = vmatprep.subr.bf16.mxu0 0
    %602 = vmatpush2.bf16.msra.mxu0 0
    %603 = vmatprep.subr.bf16.mxu0 0
    %604 = vmatpush2.bf16.msra.mxu0 0
    %605 = vmatprep.subr.bf16.mxu0 0
    %606 = vmatpush2.bf16.msra.mxu0 0
    %607 = vmatprep.subr.bf16.mxu0 0
    %608 = vmatpush2.bf16.msra.mxu0 0
    %609 = vmatprep.subr.bf16.mxu0 0
    %610 = vmatpush2.bf16.msra.mxu0 0
    %611 = vmatprep.mubr.bf16.mxu0 0
    %612 = vmatmul.mubr.bf16.gmra.mxu0 %v577
    %v613 = vpop.f32.mrf.mxu0
    %v614 = vadd.f32 %v550, %v613
    %v615 = vpop.f32.mrf.mxu0
    %v616 = vpop.f32.mrf.mxu0
    %v617 = vadd.f32 %v550, %v616
    %v618 = vpop.f32.mrf.mxu0
    %619 = vdwg.mxu0
    %vm620 = vcmask 31744
    %621 = vst.msk [vmem:[%s9] sm:$0xff] %vm620, %v614
    %622 = vst.msk [vmem:[%s9 + $0x8] sm:$0xff] %vm620, %v617
    // Predicated region
    $region50: #{tpu_custom_call.1} parent=1 // pred_check
      _
    $region51: #{tpu_custom_call.1} parent=1 // pred_check_branch
      %624 = sbr.rel (0) target = $region53
    $region52: #{tpu_custom_call.1} parent=1 // pred_region
      _
    $region53: #{tpu_custom_call.1} parent=1 // pred_fallthru
      _
    // Predicated region
    $region54: #{tpu_custom_call.1} parent=1 // pred_check
      _
    $region55: #{tpu_custom_call.1} parent=1 // pred_check_branch
      %626 = sbr.rel (0) target = $region57
    $region56: #{tpu_custom_call.1} parent=1 // pred_region
      _
    $region57: #{tpu_custom_call.1} parent=1 // pred_fallthru
      _
    %627 = vsyncpa [#allocation3], 1
    %628 = vsyncpa [#allocation5], 1

</llo_original>
